<compile_context>
chip_gen: v5e
topology: v5e:2x2
jax: 0.10.0
libtpu: 0.0.40
codegen_flags: <defaults>
</compile_context>

<pallas_src>
import functools

import jax
import jax.numpy as jnp
from jax.experimental import pallas as pl
from jax.experimental.pallas import tpu as pltpu

BN_EPS = 1e-5
LANES = 128
VMEM_LIMIT = 48 * 1024 * 1024   # fits v7x (64 MiB), above the 32 MiB default


def _round_up(x, m):
    return (x + m - 1) // m * m


def _pad2d(a, rows=None, cols=None):
    r = a.shape[0] if rows is None else rows
    c = a.shape[1] if cols is None else cols
    return jnp.pad(a, ((0, r - a.shape[0]), (0, c - a.shape[1])))


# ---------------------------------------------------------------------------
# Pass A: tiled matmul (im2col conv) + per-channel sum / sumsq accumulation
# ---------------------------------------------------------------------------
def _matmul_stats_kernel(x_ref, w_ref, y_ref, stats_ref):
    # x: (TM, K) bf16   w: (K, Cp) bf16 (resident)
    # y: (TM, Cp) f32   stats: (2, Cp) f32 accumulator (row0=sum, row1=sumsq)
    y = jnp.dot(x_ref[...], w_ref[...], preferred_element_type=jnp.float32)
    y_ref[...] = y

    @pl.when(pl.program_id(0) == 0)
    def _init():
        stats_ref[...] = jnp.zeros_like(stats_ref)

    part = jnp.concatenate(
        [jnp.sum(y, axis=0, keepdims=True),
         jnp.sum(y * y, axis=0, keepdims=True)], axis=0)
    stats_ref[...] += part


def _matmul_stats(x_cols, w_mat, block_m):
    m_pad, k = x_cols.shape
    cp = w_mat.shape[1]
    grid = m_pad // block_m
    return pl.pallas_call(
        _matmul_stats_kernel,
        out_shape=(jax.ShapeDtypeStruct((m_pad, cp), jnp.float32),
                   jax.ShapeDtypeStruct((2, cp), jnp.float32)),
        grid_spec=pltpu.PrefetchScalarGridSpec(
            num_scalar_prefetch=0,
            grid=(grid,),
            in_specs=[pl.BlockSpec((block_m, k), lambda i: (i, 0)),
                      pl.BlockSpec((k, cp), lambda i: (0, 0))],      # resident
            out_specs=(pl.BlockSpec((block_m, cp), lambda i: (i, 0)),
                       pl.BlockSpec((2, cp), lambda i: (0, 0)))),    # accum
        compiler_params=pltpu.CompilerParams(
            dimension_semantics=("arbitrary",),   # stats reduce over M tiles
            vmem_limit_bytes=VMEM_LIMIT),
    )(x_cols, w_mat)


# ---------------------------------------------------------------------------
# Pass B: y*scale + shift (+ normalized residual) + optional ReLU
# ---------------------------------------------------------------------------
def _bn_act_kernel(*refs, has_residual, apply_relu):
    if has_residual:
        y_ref, ab_ref, ry_ref, rab_ref, o_ref = refs
    else:
        y_ref, ab_ref, o_ref = refs
    out = y_ref[...] * ab_ref[0:1, :] + ab_ref[1:2, :]
    if has_residual:
        out = out + ry_ref[...] * rab_ref[0:1, :] + rab_ref[1:2, :]
    if apply_relu:
        out = jnp.maximum(out, 0.0)
    o_ref[...] = out.astype(o_ref.dtype)


def _bn_act(y, ab, res=None, res_ab=None, *, apply_relu, block_m):
    m_pad, cp = y.shape
    grid = m_pad // block_m
    has_res = res is not None
    tile = pl.BlockSpec((block_m, cp), lambda i: (i, 0))
    vec = pl.BlockSpec((2, cp), lambda i: (0, 0))        # resident per-channel
    in_specs = [tile, vec]
    args = [y, ab]
    if has_res:
        in_specs += [tile, vec]
        args += [res, res_ab]
    kernel = functools.partial(_bn_act_kernel, has_residual=has_res,
                               apply_relu=apply_relu)
    return pl.pallas_call(
        kernel,
        out_shape=jax.ShapeDtypeStruct((m_pad, cp), jnp.float32),
        grid_spec=pltpu.PrefetchScalarGridSpec(
            num_scalar_prefetch=0,
            grid=(grid,),
            in_specs=in_specs,
            out_specs=pl.BlockSpec((block_m, cp), lambda i: (i, 0))),
        compiler_params=pltpu.CompilerParams(
            dimension_semantics=("parallel",),    # shards across v7x's 2 TCs
            vmem_limit_bytes=VMEM_LIMIT),
    )(*args)


# ---------------------------------------------------------------------------
# JAX glue: im2col, weight reshape, BN affine folding, block wiring
# ---------------------------------------------------------------------------
def _im2col_3x3(x_nhwc, stride):
    """x: (N, H, W, C) -> (N*Ho*Wo, 9*C), tap-major / channel-minor."""
    n, h, w, c = x_nhwc.shape
    xp = jnp.pad(x_nhwc, ((0, 0), (1, 1), (1, 1), (0, 0)))
    ho = (h + 2 - 3) // stride + 1
    wo = (w + 2 - 3) // stride + 1
    taps = []
    for kh in range(3):
        for kw in range(3):
            taps.append(xp[:, kh:kh + stride * (ho - 1) + 1:stride,
                           kw:kw + stride * (wo - 1) + 1:stride, :])
    cols = jnp.stack(taps, axis=3)                 # (N, Ho, Wo, 9, C)
    return cols.reshape(n * ho * wo, 9 * c), ho, wo


def _w3x3_to_mat(w_oihw):
    # (Cout, Cin, 3, 3) -> (9*Cin, Cout), tap-major / Cin-minor
    cout, cin, _, _ = w_oihw.shape
    return jnp.transpose(w_oihw, (2, 3, 1, 0)).reshape(9 * cin, cout)


def _bn_affine(stats, m_true, gamma, beta):
    """Fold train-mode BN into per-channel (scale, shift) from sum/sumsq."""
    cp = stats.shape[1]
    mean = stats[0] / m_true
    var = jnp.maximum(stats[1] / m_true - mean * mean, 0.0)  # guard cancellation
    inv_std = jax.lax.rsqrt(var + BN_EPS)
    gamma_p = jnp.pad(gamma.astype(jnp.float32), (0, cp - gamma.shape[0]),
                      constant_values=1.0)
    beta_p = jnp.pad(beta.astype(jnp.float32), (0, cp - beta.shape[0]))
    scale = gamma_p * inv_std
    shift = beta_p - mean * scale
    return jnp.stack([scale, shift], axis=0)                 # (2, Cp) f32


def basic_block_forward(x_nchw, params, stride, in_planes, out_planes, *,
                        block_m=512):
    x = jnp.transpose(x_nchw, (0, 2, 3, 1)).astype(jnp.float32)   # NHWC
    n = x.shape[0]
    mid = params["conv1_w"].shape[0]
    cp_mid = _round_up(mid, LANES)
    cp_out = _round_up(out_planes, LANES)

    # ----- conv1 (3x3, stride) + bn1 + relu -----
    cols1, ho, wo = _im2col_3x3(x, stride)
    m = n * ho * wo
    bm = _round_up(min(block_m, _round_up(m, 16)), 16)
    m_pad = _round_up(m, bm)                       # zero-pad rows: exact stats
                                                   # since padded rows are 0
    cols1 = _pad2d(cols1, m_pad).astype(jnp.bfloat16)
    w1 = _pad2d(_w3x3_to_mat(params["conv1_w"]), cols=cp_mid).astype(jnp.bfloat16)
    y1, st1 = _matmul_stats(cols1, w1, bm)
    ab1 = _bn_affine(st1, m, params["bn1_gamma"], params["bn1_beta"])
    out1 = _bn_act(y1, ab1, apply_relu=True, block_m=bm)     # (m_pad, cp_mid)
    out1_nhwc = out1[:m, :mid].reshape(n, ho, wo, mid)

    # ----- shortcut: produce the raw pre-BN output + its folded affine.
    #       Its BN + residual add run inside conv2's epilogue (no extra
    #       normalize kernel, no HBM round trip of the normalized shortcut).
    if stride != 1 or in_planes != out_planes:
        xs = x[:, ::stride, ::stride, :].reshape(m, in_planes)
        xs = _pad2d(xs, m_pad).astype(jnp.bfloat16)
        ws = jnp.transpose(params["sc_w"], (2, 3, 1, 0)).reshape(in_planes,
                                                                 out_planes)
        ws = _pad2d(ws, cols=cp_out).astype(jnp.bfloat16)
        y_sc, st_sc = _matmul_stats(xs, ws, bm)
        ab_sc = _bn_affine(st_sc, m, params["sc_gamma"], params["sc_beta"])
    else:
        # identity shortcut: residual is x itself with affine (1, 0)
        y_sc = _pad2d(x.reshape(m, in_planes), m_pad, cp_out)
        ab_sc = jnp.concatenate([jnp.ones((1, cp_out), jnp.float32),
                                 jnp.zeros((1, cp_out), jnp.float32)], axis=0)

    # ----- conv2 (3x3, s=1) + bn2 + shortcut-BN + add + relu (fused) -----
    cols2, _, _ = _im2col_3x3(out1_nhwc, 1)
    cols2 = _pad2d(cols2, m_pad).astype(jnp.bfloat16)
    w2 = _pad2d(_w3x3_to_mat(params["conv2_w"]), cols=cp_out).astype(jnp.bfloat16)
    y2, st2 = _matmul_stats(cols2, w2, bm)
    ab2 = _bn_affine(st2, m, params["bn2_gamma"], params["bn2_beta"])
    out2 = _bn_act(y2, ab2, res=y_sc, res_ab=ab_sc, apply_relu=True, block_m=bm)

    out2_nhwc = out2[:m, :out_planes].reshape(n, ho, wo, out_planes)
    return jnp.transpose(out2_nhwc, (0, 3, 1, 2))            # NHWC -> NCHW


# ---------------------------------------------------------------------------
# Reference (lax.conv based, same bf16-operand / fp32-accumulate precision)
# ---------------------------------------------------------------------------
def _ref_conv(x_nhwc, w_oihw, stride, pad):
    w_hwio = jnp.transpose(w_oihw, (2, 3, 1, 0))
    return jax.lax.conv_general_dilated(
        x_nhwc.astype(jnp.bfloat16), w_hwio.astype(jnp.bfloat16),
        window_strides=(stride, stride), padding=((pad, pad), (pad, pad)),
        dimension_numbers=("NHWC", "HWIO", "NHWC"),
        preferred_element_type=jnp.float32)


def _ref_bn(y, gamma, beta):
    mean = jnp.mean(y, axis=(0, 1, 2), keepdims=True)
    var = jnp.mean(jnp.square(y), axis=(0, 1, 2), keepdims=True) - jnp.square(mean)
    return (y - mean) * jax.lax.rsqrt(var + BN_EPS) * gamma + beta


def basic_block_reference(x_nchw, params, stride, in_planes, out_planes):
    x = jnp.transpose(x_nchw, (0, 2, 3, 1)).astype(jnp.float32)
    out = _ref_conv(x, params["conv1_w"], stride, 1)
    out = jax.nn.relu(_ref_bn(out, params["bn1_gamma"], params["bn1_beta"]))
    out = _ref_conv(out, params["conv2_w"], 1, 1)
    out = _ref_bn(out, params["bn2_gamma"], params["bn2_beta"])
    if stride != 1 or in_planes != out_planes:
        sc = _ref_conv(x, params["sc_w"], stride, 0)
        sc = _ref_bn(sc, params["sc_gamma"], params["sc_beta"])
    else:
        sc = x
    return jnp.transpose(jax.nn.relu(out + sc), (0, 3, 1, 2))


# ---------------------------------------------------------------------------
def _make_params(key, in_c, mid_c, out_c, with_shortcut):
    ks = jax.random.split(key, 8)
    p = {
        "conv1_w": 0.2 * jax.random.normal(ks[0], (mid_c, in_c, 3, 3), jnp.float32),
        "bn1_gamma": 1.0 + 0.1 * jax.random.normal(ks[1], (mid_c,), jnp.float32),
        "bn1_beta": 0.1 * jax.random.normal(ks[2], (mid_c,), jnp.float32),
        "conv2_w": 0.2 * jax.random.normal(ks[3], (out_c, mid_c, 3, 3), jnp.float32),
        "bn2_gamma": 1.0 + 0.1 * jax.random.normal(ks[4], (out_c,), jnp.float32),
        "bn2_beta": 0.1 * jax.random.normal(ks[5], (out_c,), jnp.float32),
    }
    if with_shortcut:
        p["sc_w"] = 0.2 * jax.random.normal(ks[6], (out_c, in_c, 1, 1), jnp.float32)
        p["sc_gamma"] = 1.0 + 0.1 * jax.random.normal(ks[7], (out_c,), jnp.float32)
        p["sc_beta"] = 0.05 * jnp.ones((out_c,), jnp.float32)
    return p


if __name__ == "__main__":
    key = jax.random.PRNGKey(0)
    k1, k2, k3, k4 = jax.random.split(key, 4)

    # --- downsampling block: in=4 -> out=8, stride=2, 1x1-conv shortcut ---
    x1 = jax.random.normal(k1, (2, 4, 16, 16), jnp.float32)
    p1 = _make_params(k2, 4, 8, 8, with_shortcut=True)
    out1 = jax.block_until_ready(
        basic_block_forward(x1, p1, stride=2, in_planes=4, out_planes=8,
                            block_m=32))          # M=128 -> grid of 4 tiles
    ref1 = jax.block_until_ready(basic_block_reference(x1, p1, 2, 4, 8))
    assert out1.shape == (2, 8, 8, 8), out1.shape
    # bf16 matmul operands (fp32 accumulation) -> compare at bf16-level tol
    assert jnp.allclose(out1, ref1, rtol=1e-2, atol=1e-2), \
        float(jnp.max(jnp.abs(out1 - ref1)))

    # --- identity block: in=out=8, stride=1 (no shortcut conv) ---
    x2 = jax.random.normal(k3, (2, 8, 16, 16), jnp.float32)
    p2 = _make_params(k4, 8, 8, 8, with_shortcut=False)
    out2 = jax.block_until_ready(
        basic_block_forward(x2, p2, stride=1, in_planes=8, out_planes=8,
                            block_m=64))          # M=512 -> grid of 8 tiles
    ref2 = jax.block_until_ready(basic_block_reference(x2, p2, 1, 8, 8))
    assert out2.shape == (2, 8, 16, 16), out2.shape
    assert jnp.allclose(out2, ref2, rtol=1e-2, atol=1e-2), \
        float(jnp.max(jnp.abs(out2 - ref2)))

    print("KERNEL_OK")
</pallas_src>

<mosaic_0001>
module attributes {stable_mosaic.version = 11 : i64} {
  func.func @_matmul_stats_kernel(%arg0: i32, %arg1: memref<32x36xbf16, #tpu.memory_space<vmem>>, %arg2: memref<36x128xbf16, #tpu.memory_space<vmem>>, %arg3: memref<32x128xf32, #tpu.memory_space<vmem>>, %arg4: memref<2x128xf32, #tpu.memory_space<vmem>>) attributes {dimension_semantics = [#tpu.dimension_semantics<arbitrary>], iteration_bounds = array<i64: 4>, scalar_prefetch = 0 : i64, scratch_operands = 0 : i64, tpu.core_type = #tpu.core_type<tc>, window_params = [{transform_indices = @transform_0, window_bounds = array<i64: 32, 36>}, {pipeline_mode = #tpu.pipeline_mode<synchronous>, transform_indices = @transform_1, window_bounds = array<i64: 36, 128>}, {transform_indices = @transform_2, window_bounds = array<i64: 32, 128>}, {pipeline_mode = #tpu.pipeline_mode<synchronous>, transform_indices = @transform_3, window_bounds = array<i64: 2, 128>}]} {
    %c0 = arith.constant 0 : index
    %c0_0 = arith.constant 0 : index
    %0 = vector.load %arg1[%c0, %c0_0] : memref<32x36xbf16, #tpu.memory_space<vmem>>, vector<32x36xbf16>
    %c0_1 = arith.constant 0 : index
    %c0_2 = arith.constant 0 : index
    %1 = vector.load %arg2[%c0_1, %c0_2] : memref<36x128xbf16, #tpu.memory_space<vmem>>, vector<36x128xbf16>
    %cst = arith.constant dense<0.000000e+00> : vector<32x128xf32>
    %2 = tpu.matmul %0, %1, %cst {dimension_numbers = #tpu.dot_dimension_numbers<[1], [0], [0], [1], [0, 0, 1, 1], [], []>} : vector<32x36xbf16>, vector<36x128xbf16>, vector<32x128xf32> -> vector<32x128xf32>
    %c0_3 = arith.constant 0 : index
    %c0_4 = arith.constant 0 : index
    %3 = vector.load %arg3[%c0_3, %c0_4] : memref<32x128xf32, #tpu.memory_space<vmem>>, vector<32x128xf32>
    tpu.vector_store %arg3[%c0_3, %c0_4], %2 {strides = array<i32>} : memref<32x128xf32, #tpu.memory_space<vmem>>, vector<32x128xf32>,
    %c0_i32 = arith.constant 0 : i32
    %4 = arith.cmpi eq, %arg0, %c0_i32 : i32
    %5 = arith.extui %4 : i1 to i32
    %c0_i32_5 = arith.constant 0 : i32
    %6 = arith.cmpi ne, %5, %c0_i32_5 : i32
    scf.if %6 {
      %cst_12 = arith.constant 0.000000e+00 : f32
      %16 = vector.broadcast %cst_12 : f32 to vector<2x128xf32>
      %c0_13 = arith.constant 0 : index
      %c0_14 = arith.constant 0 : index
      %17 = vector.load %arg4[%c0_13, %c0_14] : memref<2x128xf32, #tpu.memory_space<vmem>>, vector<2x128xf32>
      tpu.vector_store %arg4[%c0_13, %c0_14], %16 {strides = array<i32>} : memref<2x128xf32, #tpu.memory_space<vmem>>, vector<2x128xf32>,
    } else {
    }
    %cst_6 = arith.constant dense<0.000000e+00> : vector<128xf32>
    %7 = vector.multi_reduction <add>, %2, %cst_6 [0] : vector<32x128xf32> to vector<128xf32>
    %8 = vector.shape_cast %7 : vector<128xf32> to vector<1x128xf32>
    %9 = arith.mulf %2, %2 : vector<32x128xf32>
    %cst_7 = arith.constant dense<0.000000e+00> : vector<128xf32>
    %10 = vector.multi_reduction <add>, %9, %cst_7 [0] : vector<32x128xf32> to vector<128xf32>
    %11 = vector.shape_cast %10 : vector<128xf32> to vector<1x128xf32>
    %12 = tpu.concatenate %8, %11 in 0 : vector<1x128xf32>, vector<1x128xf32> -> vector<2x128xf32>
    %c0_8 = arith.constant 0 : index
    %c0_9 = arith.constant 0 : index
    %13 = vector.load %arg4[%c0_8, %c0_9] : memref<2x128xf32, #tpu.memory_space<vmem>>, vector<2x128xf32>
    %14 = arith.addf %13, %12 : vector<2x128xf32>
    %c0_10 = arith.constant 0 : index
    %c0_11 = arith.constant 0 : index
    %15 = vector.load %arg4[%c0_10, %c0_11] : memref<2x128xf32, #tpu.memory_space<vmem>>, vector<2x128xf32>
    tpu.vector_store %arg4[%c0_10, %c0_11], %14 {strides = array<i32>} : memref<2x128xf32, #tpu.memory_space<vmem>>, vector<2x128xf32>,
    return
  }
  func.func @transform_0(%arg0: i32) -> (i32, i32) {
    %c0_i32 = arith.constant 0 : i32
    %c0_i32_0 = arith.constant 0 : i32
    return %arg0, %c0_i32 : i32, i32
  }
  func.func @transform_1(%arg0: i32) -> (i32, i32) {
    %c0_i32 = arith.constant 0 : i32
    %c0_i32_0 = arith.constant 0 : i32
    %c0_i32_1 = arith.constant 0 : i32
    return %c0_i32, %c0_i32_0 : i32, i32
  }
  func.func @transform_2(%arg0: i32) -> (i32, i32) {
    %c0_i32 = arith.constant 0 : i32
    %c0_i32_0 = arith.constant 0 : i32
    return %arg0, %c0_i32 : i32, i32
  }
  func.func @transform_3(%arg0: i32) -> (i32, i32) {
    %c0_i32 = arith.constant 0 : i32
    %c0_i32_0 = arith.constant 0 : i32
    %c0_i32_1 = arith.constant 0 : i32
    return %c0_i32, %c0_i32_0 : i32, i32
  }
}

</mosaic_0001>

<llo_original>
// kernel: tpu_custom_call.1
$region0: #{tpu_custom_call.1}
  #allocation0 [shape = 'u32[]', space=smem, size = 0x4, offset = 0x4, fixed_abs, tag = 'smem constant byte address 0x4 - core index']
  #allocation1 [shape = 'u32[72,128]{1,0:T(1,128)}', space=vmem, size = 0x9000, scoped, tag = 'internal scratch']
  %s0 = inlined_call_operand.vmem [shape: bf16[128,36], index: 0, kind: input, shape index: {}]
  %s1 = inlined_call_operand.vmem [shape: bf16[36,128], index: 1, kind: input, shape index: {}]
  %s2 = inlined_call_operand.hbm [shape: f32[128,128], index: 2, kind: output, shape index: {0}]
  %s3 = inlined_call_operand.hbm [shape: f32[2,128], index: 3, kind: output, shape index: {1}]
  %4 = xla_tuple %s2, %s3
  %s5 = sld [smem:[#allocation0]]
  $region53: #{tpu_custom_call.1} parent=0
    _
  %s7 = ssub.s32 1, %s5
  %s8 = scalar_select 0, %s7, %s5
  $region1: #{tpu_custom_call.1} parent=0
    #allocation2 [shape = 'u8[32768]{0}', space=vmem, size = 0x8000, scoped, tag = 'output window, operand 0']
    #allocation3 [shape = 's32[2]{0}', space=sflag, size = 0x8, scoped, tag = 'scoped memory for tpu_custom_call.1']
    #allocation4 [shape = 'u8[1024]{0}', space=vmem, size = 0x400, scoped, tag = 'output window, operand 1, single buffered']
    #allocation5 [shape = 's32[1]{0}', space=sflag, size = 0x4, scoped, tag = 'scoped memory for tpu_custom_call.1']
    %9 = vsyncpa [#allocation3], 0
    %s10 = scalar_lea.sflag [#allocation3], 1
    %11 = vsyncpa %s10, 0
    %12 = vsyncpa [#allocation5], 0
    loop: start=0, step=1, limit=6
    $region2: #{tpu_custom_call.1} parent=1 // loop_pre_header
      _
    $region3: #{tpu_custom_call.1} parent=1 // loop_header
      %s14 = sphi 0, %s18
      %p15 = scmp.ge.s32.totalorder %s14, 6
      %s24 = sphi 0, %s26
      %s27 = sphi 0, %s24
      %s28 = sphi 0, %s27
      %s44 = sphi 0, %s28
      %s48 = sphi 0, %s48
      %s50 = sphi 0, %s48
      %s51 = sphi 0, %s50
      %s65 = sphi 0, %s51
      %s71 = sphi 0, %s73
      %s74 = sphi 0, %s71
      %s75 = sphi 0, %s74
      %s91 = sphi 0, %s75
      %s95 = sphi 0, %s95
      %s97 = sphi 0, %s95
      %s98 = sphi 0, %s97
      %s112 = sphi 0, %s98
    $region4: #{tpu_custom_call.1} parent=1 // loop_header_branch
      %17 = sbr.rel (%p15) target = $region8
    $region5: #{tpu_custom_call.1} parent=1 // loop_body
      %s19 = ssub.s32 %s14, 1
      %s20 = ssub.s32 %s14, 2
      %s21 = sadd.s32 %s14, 1
      %s22 = ssub.s32 %s14, %s21
      %p23 = scmp.eq.s32.totalorder %s22, 0
      %s25 = sadd.s32 %s24, 1
      %s26 = scalar_select %p23, %s24, %s25
      %p29 = pneg %p23
      %p30 = scmp.eq.s32.totalorder %s14, 3
      %p31 = por %p29, %p30
      %p32 = scmp.ne.s32.totalorder %s24, %s27
      %p33 = scmp.eq.s32.totalorder %s14, 0
      %p34 = por %p32, %p33
      %p35 = scmp.ne.s32.totalorder %s24, %s27
      %p36 = scmp.eq.s32.totalorder %s19, 3
      %p37 = por %p35, %p36
      %p38 = scmp.ne.s32.totalorder %s27, %s28
      %p39 = scmp.eq.s32.totalorder %s19, 0
      %p40 = por %p38, %p39
      %p41 = scmp.ne.s32.totalorder %s27, %s28
      %p42 = scmp.eq.s32.totalorder %s20, 3
      %p43 = por %p41, %p42
      %p45 = scmp.ne.s32.totalorder %s28, %s44
      %p46 = scmp.eq.s32.totalorder %s20, 0
      %p47 = por %p45, %p46
      %s49 = sadd.s32 %s48, 1
      %p52 = scmp.eq.s32.totalorder %s14, 3
      %p53 = scmp.ne.s32.totalorder %s48, %s50
      %p54 = scmp.eq.s32.totalorder %s14, 0
      %p55 = por %p53, %p54
      %p56 = scmp.ne.s32.totalorder %s48, %s50
      %p57 = scmp.eq.s32.totalorder %s19, 3
      %p58 = por %p56, %p57
      %p59 = scmp.ne.s32.totalorder %s50, %s51
      %p60 = scmp.eq.s32.totalorder %s19, 0
      %p61 = por %p59, %p60
      %p62 = scmp.ne.s32.totalorder %s50, %s51
      %p63 = scmp.eq.s32.totalorder %s20, 3
      %p64 = por %p62, %p63
      %p66 = scmp.ne.s32.totalorder %s51, %s65
      %p67 = scmp.eq.s32.totalorder %s20, 0
      %p68 = por %p66, %p67
      %s69 = ssub.s32 %s14, %s21
      %p70 = scmp.eq.s32.totalorder %s69, 0
      %s72 = sadd.s32 %s71, 1
      %s73 = scalar_select %p70, %s71, %s72
      %p76 = pneg %p70
      %p77 = scmp.eq.s32.totalorder %s14, 3
      %p78 = por %p76, %p77
      %p79 = scmp.ne.s32.totalorder %s71, %s74
      %p80 = scmp.eq.s32.totalorder %s14, 0
      %p81 = por %p79, %p80
      %p82 = scmp.ne.s32.totalorder %s71, %s74
      %p83 = scmp.eq.s32.totalorder %s19, 3
      %p84 = por %p82, %p83
      %p85 = scmp.ne.s32.totalorder %s74, %s75
      %p86 = scmp.eq.s32.totalorder %s19, 0
      %p87 = por %p85, %p86
      %p88 = scmp.ne.s32.totalorder %s74, %s75
      %p89 = scmp.eq.s32.totalorder %s20, 3
      %p90 = por %p88, %p89
      %p92 = scmp.ne.s32.totalorder %s75, %s91
      %p93 = scmp.eq.s32.totalorder %s20, 0
      %p94 = por %p92, %p93
      %s96 = sadd.s32 %s95, 1
      %p99 = scmp.eq.s32.totalorder %s14, 3
      %p100 = scmp.ne.s32.totalorder %s95, %s97
      %p101 = scmp.eq.s32.totalorder %s14, 0
      %p102 = por %p100, %p101
      %p103 = scmp.ne.s32.totalorder %s95, %s97
      %p104 = scmp.eq.s32.totalorder %s19, 3
      %p105 = por %p103, %p104
      %p106 = scmp.ne.s32.totalorder %s97, %s98
      %p107 = scmp.eq.s32.totalorder %s19, 0
      %p108 = por %p106, %p107
      %p109 = scmp.ne.s32.totalorder %s97, %s98
      %p110 = scmp.eq.s32.totalorder %s20, 3
      %p111 = por %p109, %p110
      %p113 = scmp.ne.s32.totalorder %s98, %s112
      %p114 = scmp.eq.s32.totalorder %s20, 0
      %p115 = por %p113, %p114
      %p116 = scmp.le.s32.totalorder 1, %s14
      %p117 = scmp.lt.s32.totalorder %s14, 5
      %p118 = pnand %p116, %p117
      %p119 = pneg %p118
      // Predicated region
      $region9: #{tpu_custom_call.1} parent=5 // pred_check
        _
      $region10: #{tpu_custom_call.1} parent=5 // pred_check_branch
        %121 = sbr.rel (%p118) target = $region12
      $region11: #{tpu_custom_call.1} parent=5 // pred_region
        %s122 = ssub.s32 %s14, 1
        // Predicated region
        $region13: #{tpu_custom_call.1} parent=11 // pred_check
          %p123 = pneg %p61
        $region14: #{tpu_custom_call.1} parent=11 // pred_check_branch
          %125 = sbr.rel (%p123) target = $region16
        $region15: #{tpu_custom_call.1} parent=11 // pred_region
          _
        $region16: #{tpu_custom_call.1} parent=11 // pred_fallthru
          _
      $region12: #{tpu_custom_call.1} parent=5 // pred_fallthru
        _
      %p126 = scmp.lt.s32.totalorder %s14, 4
      // Predicated region
      $region17: #{tpu_custom_call.1} parent=5 // pred_check
        %p127 = pneg %p126
      $region18: #{tpu_custom_call.1} parent=5 // pred_check_branch
        %129 = sbr.rel (%p127) target = $region20
      $region19: #{tpu_custom_call.1} parent=5 // pred_region
        // Predicated region
        $region21: #{tpu_custom_call.1} parent=19 // pred_check
          %p130 = pneg %p34
        $region22: #{tpu_custom_call.1} parent=19 // pred_check_branch
          %132 = sbr.rel (%p130) target = $region24
        $region23: #{tpu_custom_call.1} parent=19 // pred_region
          %s133 = smul.u32 4, %s14
          %p134 = scmp.lt.s32.totalorder %s133, 15
          %s135 = scalar_select %p134, %s133, 15
          %s136 = smul.addr %s135, 4
          %s137 = scalar_lea.vmem %s0, %s136
          %s138 = smul.u32 4, %s14
        $region24: #{tpu_custom_call.1} parent=19 // pred_fallthru
          _
      $region20: #{tpu_custom_call.1} parent=5 // pred_fallthru
        _
      %p139 = scmp.le.s32.totalorder 1, %s14
      %p140 = scmp.lt.s32.totalorder %s14, 5
      %p141 = pnand %p139, %p140
      %p142 = pneg %p141
      // Predicated region
      $region25: #{tpu_custom_call.1} parent=5 // pred_check
        _
      $region26: #{tpu_custom_call.1} parent=5 // pred_check_branch
        %144 = sbr.rel (%p141) target = $region28
      $region27: #{tpu_custom_call.1} parent=5 // pred_region
        %s145 = ssub.s32 %s14, 1
        %s146 = smul.u32 4, %s19
        %p147 = scmp.lt.s32.totalorder %s146, 15
        %s148 = scalar_select %p147, %s146, 15
        %s149 = smul.addr %s148, 4
        %s150 = scalar_lea.vmem %s0, %s149
        %p151 = pneg %p40
        %p152 = pneg %p37
        %p153 = pneg %p61
        %p154 = pneg %p58
        %p155 = pneg %p87
        %p156 = pneg %p84
        %s157 = sand.u32 %s74, 1
        %s158 = scalar_lea.sflag [#allocation3], %s157
        %s159 = sand.u32 %s74, 1
        %s160 = smul.addr %s159, 32
        %s161 = scalar_lea.vmem [#allocation2], %s160
        %p162 = pneg %p108
        %p163 = pneg %p105
        %s164 = smul.u32 4, %s19
        %p165 = scmp.lt.s32.totalorder %s164, 15
        %s166 = scalar_select %p165, %s164, 15
        %s167 = smul.addr %s166, 4
        %s168 = scalar_lea.vmem %s0, %s167
        %s169 = smul.u32 4, %s19
        %s170 = smul.u32 4, %s19
        %v172 = vld [vmem:[%s168] sm:$0xf]
        %v173 = vld [vmem:[%s168 + $0x4] sm:$0xf]
        %v174 = vld [vmem:[%s168 + $0x8] sm:$0xf]
        %v175 = vld [vmem:[%s168 + $0xc] sm:$0xf]
        %v176 = vld [vmem:[%s1] sm:$0xf]
        %v177 = vld [vmem:[%s1 + $0x4] sm:$0xf]
        %v178 = vld [vmem:[%s1 + $0x8] sm:$0xf]
        %v179 = vld [vmem:[%s1 + $0xc] sm:$0xf]
        %v180 = vld [vmem:[%s1 + $0x10] sm:$0x3]
        %v185 = vunpack.c.l.b16 %v172
        %v186 = vunpack.c.l.b16 %v173
        %v187 = vunpack.c.l.b16 %v174
        %v188 = vunpack.c.l.b16 %v175
        %v189 = vpack.c.b16 %v186, %v185
        %v190 = vpack.c.b16 %v188, %v187
        %v196 = vunpack.c.l.b16 %v176
        %v197 = vunpack.c.l.b16 %v177
        %v198 = vunpack.c.l.b16 %v178
        %v199 = vunpack.c.l.b16 %v179
        %v200 = vunpack.c.l.b16 %v180
        %v201 = vpack.c.b16 %v197, %v196
        %v202 = vpack.c.b16 %v199, %v198
        %v203 = vpack.c.b16 %v200, %v200
        %vm206 = vcmask 293888
        %v208 = vsel %vm206, %v189, 0
        %v211 = vsel %vm206, %v190, 0
        %vm213 = vcmask 1041408
        %v215 = vsel %vm213, %v203, 0
        %217 = vmatpush.bf16.msra.mxu0 0
        %218 = vmatpush.bf16.msra.mxu0 0
        %219 = vmatpush.bf16.msra.mxu0 0
        %220 = vmatpush.bf16.msra.mxu0 0
        %221 = vmatpush.bf16.msra.mxu0 0
        %222 = vmatpush.bf16.msra.mxu0 %v215
        %223 = vmatpush.bf16.msra.mxu0 %v202
        %224 = vmatpush.bf16.msra.mxu0 %v201
        %225 = vmatmul.bf16.gmra.mxu0 %v208
        %v226 = vpop.f32.mrf.mxu0
        %v227 = vadd.f32 0.0, %v226
        %v228 = vpop.f32.mrf.mxu0
        %v229 = vadd.f32 0.0, %v228
        %230 = vmatmul.bf16.gmra.mxu0 %v211
        %v231 = vpop.f32.mrf.mxu0
        %v232 = vadd.f32 0.0, %v231
        %v233 = vpop.f32.mrf.mxu0
        %v234 = vadd.f32 0.0, %v233
        %235 = vdwg.mxu0
        %236 = vst [vmem:[%s161] sm:$0xff] %v227
        %237 = vst [vmem:[%s161 + $0x8] sm:$0xff] %v229
        %238 = vst [vmem:[%s161 + $0x10] sm:$0xff] %v232
        %239 = vst [vmem:[%s161 + $0x18] sm:$0xff] %v234
        %p240 = scmp.eq.s32.totalorder %s19, 0
        // Predicated region
        $region29: #{tpu_custom_call.1} parent=27 // pred_check
          %p241 = pneg %p240
        $region30: #{tpu_custom_call.1} parent=27 // pred_check_branch
          %243 = sbr.rel (%p241) target = $region32
        $region31: #{tpu_custom_call.1} parent=27 // pred_region
          %244 = vst [vmem:[#allocation4] sm:$0x3] 0.0
        $region32: #{tpu_custom_call.1} parent=27 // pred_fallthru
          _
        %v245 = vadd.f32 %v227, %v229
        %v246 = vadd.f32 %v245, %v232
        %v247 = vadd.f32 %v246, %v234
        %v248 = vrot.slane %v247, 4
        %v249 = vadd.f32 %v247, %v248
        %v250 = vrot.slane %v249, 2
        %v251 = vadd.f32 %v249, %v250
        %v252 = vrot.slane %v251, 1
        %v253 = vadd.f32 %v251, %v252
        %v254 = vmul.f32 %v227, %v227
        %v255 = vmul.f32 %v229, %v229
        %v256 = vmul.f32 %v232, %v232
        %v257 = vmul.f32 %v234, %v234
        %v258 = vadd.f32 %v254, %v255
        %v259 = vadd.f32 %v258, %v256
        %v260 = vadd.f32 %v259, %v257
        %v261 = vrot.slane %v260, 4
        %v262 = vadd.f32 %v260, %v261
        %v263 = vrot.slane %v262, 2
        %v264 = vadd.f32 %v262, %v263
        %v265 = vrot.slane %v264, 1
        %v266 = vadd.f32 %v264, %v265
        %vm267 = vcmask 1040384
        %v268 = vsel %vm267, %v253, %v266
        %v269 = vld [vmem:[#allocation4] sm:$0x3]
        %v270 = vadd.f32 %v269, %v268
        %271 = vst [vmem:[#allocation4] sm:$0x3] %v270
        %s272 = sand.u32 %s74, 1
        %s273 = scalar_lea.sflag [#allocation3], %s272
        %s274 = sand.u32 %s74, 1
        %s275 = smul.addr %s274, 32
        %s276 = scalar_lea.vmem [#allocation2], %s275
        // Predicated region
        $region33: #{tpu_custom_call.1} parent=27 // pred_check
          %p277 = pneg %p84
        $region34: #{tpu_custom_call.1} parent=27 // pred_check_branch
          %279 = sbr.rel (%p277) target = $region36
        $region35: #{tpu_custom_call.1} parent=27 // pred_region
          %s280 = smul.u32 4, %s19
          %282 = vsyncadd %s273, 0
          %s283 = smul.addr %s280, 8
          %s284 = scalar_lea.hbm %s2, %s283
          %s285 = sshll.u32 %s276, 4
          %s286 = int_to_ptr.vmem [resolvable:$true] %s285
          %s287 = sshll.u32 %s284, 4
          %s288 = int_to_ptr.hbm [resolvable:$true] %s287
          %293 = dma.vmem_to_hbm [thread:$0]  %s286, 512, %s288, %s273, 128, 128, 8
        $region36: #{tpu_custom_call.1} parent=27 // pred_fallthru
          _
        // Predicated region
        $region37: #{tpu_custom_call.1} parent=27 // pred_check
          %p294 = pneg %p105
        $region38: #{tpu_custom_call.1} parent=27 // pred_check_branch
          %296 = sbr.rel (%p294) target = $region40
        $region39: #{tpu_custom_call.1} parent=27 // pred_region
          %298 = vsyncadd [#allocation5], 0
          %s300 = sshll.u32 [#allocation4], 4
          %s301 = int_to_ptr.vmem [resolvable:$true] %s300
          %s302 = sshll.u32 %s3, 4
          %s303 = int_to_ptr.hbm [resolvable:$true] %s302
          %305 = dma.vmem_to_hbm [thread:$0]  %s301, 32, %s303, [#allocation5]
        $region40: #{tpu_custom_call.1} parent=27 // pred_fallthru
          _
        // Predicated region
        $region41: #{tpu_custom_call.1} parent=27 // pred_check
          %p306 = pneg %p105
        $region42: #{tpu_custom_call.1} parent=27 // pred_check_branch
          %308 = sbr.rel (%p306) target = $region44
        $region43: #{tpu_custom_call.1} parent=27 // pred_region
          %310 = dma.done [#allocation5], 32
        $region44: #{tpu_custom_call.1} parent=27 // pred_fallthru
          _
      $region28: #{tpu_custom_call.1} parent=5 // pred_fallthru
        _
      %p311 = scmp.le.s32.totalorder 2, %s14
      // Predicated region
      $region45: #{tpu_custom_call.1} parent=5 // pred_check
        %p312 = pneg %p311
      $region46: #{tpu_custom_call.1} parent=5 // pred_check_branch
        %314 = sbr.rel (%p312) target = $region48
      $region47: #{tpu_custom_call.1} parent=5 // pred_region
        %s315 = ssub.s32 %s14, 2
        // Predicated region
        $region49: #{tpu_custom_call.1} parent=47 // pred_check
          %p316 = pneg %p90
        $region50: #{tpu_custom_call.1} parent=47 // pred_check_branch
          %318 = sbr.rel (%p316) target = $region52
        $region51: #{tpu_custom_call.1} parent=47 // pred_region
          %s319 = sand.u32 %s75, 1
          %s320 = scalar_lea.sflag [#allocation3], %s319
          %s321 = sand.u32 %s75, 1
          %s322 = smul.addr %s321, 32
          %s323 = scalar_lea.vmem [#allocation2], %s322
          %325 = dma.done %s320, 512
        $region52: #{tpu_custom_call.1} parent=47 // pred_fallthru
          _
      $region48: #{tpu_custom_call.1} parent=5 // pred_fallthru
        _
    $region6: #{tpu_custom_call.1} parent=1 // loop_footer
      %s18 = sadd.s32 1, %s14
    $region7: #{tpu_custom_call.1} parent=1 // loop_footer_branch
      %13 = sbr.rel target = $region3
    $region8: #{tpu_custom_call.1} parent=1 // loop_exit
      _
    %326 = vsyncpa [#allocation3], 1
    %s327 = scalar_lea.sflag [#allocation3], 1
    %328 = vsyncpa %s327, 1
    %329 = vsyncpa [#allocation5], 1

</llo_original>
